<compile_context>
chip_gen: v6e
topology: v6e:2x2x1
jax: 0.10.0
libtpu: 0.0.40
codegen_flags: <defaults>
</compile_context>

<pallas_src>
import functools

import jax
import jax.numpy as jnp
from jax.experimental import pallas as pl
from jax.experimental.pallas import tpu as pltpu


def _round_up(x, m):
    return ((x + m - 1) // m) * m


def _vmem_capacity_bytes():
    """Physical VMEM of the current chip (v5e/v6e: 128 MiB, v7x per-TC: 64 MiB)."""
    try:
        return int(pltpu.get_tpu_info().vmem_capacity_bytes)
    except Exception:
        return 64 * 1024 * 1024  # conservative fallback (v7x)


def _pick_tile_rows(total_rows, k_pack, n_pack, vmem_cap):
    """Pick a pixel-row tile (multiple of 16 for bf16 sublane packing), bounded by a
    per-generation VMEM budget that accounts for 128-lane padding of both the input
    and output tiles (the previous estimator under-counted by up to 8x)."""
    in_row = _round_up(k_pack, 128) * 2           # bf16 patch row, lane-padded
    out_row = _round_up(n_pack, 128) * 2          # bf16 output row, lane-padded
    row_bytes = 2 * (in_row + out_row)            # double-buffered in + out tiles
    budget = max(8 * 1024 * 1024, vmem_cap // 4)  # ~16 MiB on v7x, ~32 MiB on v5e/v6e
    tile = max(16, (budget // row_bytes) // 16 * 16)
    # Keep >= 4 parallel grid steps so both v7x TensorCores stay busy with pipeline depth.
    per_step = max(16, _round_up(-(-total_rows // 4), 16))
    tile = min(tile, per_step, 8192)
    tile = min(tile, _round_up(total_rows, 16))
    total_pad = _round_up(total_rows, tile)
    return tile, total_pad


def _convt_fused_kernel(p_ref, w_ref, b_ref, o_ref):
    # p_ref : (TILE_ROWS, r*4*Cin)   bf16 packed im2col patches (r pixels per row)
    # w_ref : (r*4*Cin, r*4*Cout)    bf16 block-diagonal fused weights (resident)
    # b_ref : (1, r*4*Cout)          f32 bias replicated over parities and r (resident)
    # o_ref : (TILE_ROWS, r*4*Cout)  bf16 output tile (lane axis >= 128 -> unmasked vst)
    y = jnp.dot(p_ref[...], w_ref[...], preferred_element_type=jnp.float32)
    y = jnp.maximum(y + b_ref[...], 0.0)          # bias + ReLU in f32, in-register
    o_ref[...] = y.astype(o_ref.dtype)            # single lane-dense store per tile


@functools.partial(jax.jit, static_argnames=("compute_dtype",))
def basic_block_transposed(x_nchw, weight, bias, compute_dtype=jnp.bfloat16):
    """ConvTranspose2d(Cin, Cout, kernel_size=4, padding=0, stride=2) + ReLU.

    x_nchw : (N, Cin, H, W)        float32
    weight : (Cin, Cout, 4, 4)     PyTorch ConvTranspose2d weight layout
    bias   : (Cout,)
    returns: (N, Cout, 2H+2, 2W+2) float32 (bf16-rounded internally)
    """
    N, Cin, H, W = x_nchw.shape
    Cout = weight.shape[1]
    Ho, Wo = H + 1, W + 1                 # per-parity output sub-grid size
    Npix = Ho * Wo
    Kdim, Ndim = 4 * Cin, 4 * Cout

    # Pack r pixel rows per matmul row so the kernel's output lane axis is >= 128.
    r = max(1, 128 // Ndim)
    k_pack, n_pack = r * Kdim, r * Ndim

    packed_rows = -(-Npix // r)           # packed rows per batch image
    npix_pad = packed_rows * r
    total_rows = N * packed_rows

    vmem_cap = _vmem_capacity_bytes()
    tile_rows, total_rows_pad = _pick_tile_rows(total_rows, k_pack, n_pack, vmem_cap)

    # ---- glue: layout + im2col in bf16 (pure data movement) ------------------------
    x = jnp.transpose(x_nchw, (0, 2, 3, 1)).astype(compute_dtype)     # NHWC bf16
    xp = jnp.pad(x, ((0, 0), (1, 1), (1, 1), (0, 0)))                 # (N, H+2, W+2, Cin)
    shifts = [xp[:, 1 - da:1 - da + Ho, 1 - db:1 - db + Wo, :]
              for da in (0, 1) for db in (0, 1)]
    patches = jnp.stack(shifts, axis=3).reshape(N, Npix, Kdim)        # (N, Npix, 4*Cin)
    patches = jnp.pad(patches, ((0, 0), (0, npix_pad - Npix), (0, 0)))
    patches = patches.reshape(N * packed_rows, k_pack)                # r pixels per row
    patches = jnp.pad(patches, ((0, total_rows_pad - total_rows), (0, 0)))

    # ---- glue: fused 4-parity weight + block-diagonal repack -------------------------
    # w_fused[(da,db,ci), (p,q,co)] = weight[ci, co, p + 2*da, q + 2*db]
    w6 = weight.reshape(Cin, Cout, 2, 2, 2, 2)        # (ci, co, da, p, db, q)
    w6 = jnp.transpose(w6, (2, 4, 0, 3, 5, 1))        # (da, db, ci, p, q, co)
    w_fused = w6.reshape(Kdim, Ndim)
    w_bd = jnp.kron(jnp.eye(r, dtype=w_fused.dtype), w_fused).astype(compute_dtype)
    b_row = jnp.tile(bias, 4 * r).reshape(1, n_pack).astype(jnp.float32)

    # VMEM actually needed (+ generous headroom), capped well below physical VMEM.
    in_row = _round_up(k_pack, 128) * 2
    out_row = _round_up(n_pack, 128) * 2
    w_bytes = _round_up(k_pack, 16) * _round_up(n_pack, 128) * 2
    needed = 2 * tile_rows * (in_row + out_row) + 2 * w_bytes + 8 * 128 * 4
    vmem_limit = int(min(vmem_cap // 2, max(16 * 1024 * 1024, 2 * needed)))

    grid = (total_rows_pad // tile_rows,)
    out = pl.pallas_call(
        _convt_fused_kernel,
        out_shape=jax.ShapeDtypeStruct((total_rows_pad, n_pack), compute_dtype),
        grid=grid,
        in_specs=[
            pl.BlockSpec((tile_rows, k_pack), lambda t: (t, 0)),
            pl.BlockSpec((k_pack, n_pack), lambda t: (0, 0)),   # resident across steps
            pl.BlockSpec((1, n_pack), lambda t: (0, 0)),        # resident across steps
        ],
        out_specs=pl.BlockSpec((tile_rows, n_pack), lambda t: (t, 0)),
        compiler_params=pltpu.CompilerParams(
            dimension_semantics=("parallel",),
            vmem_limit_bytes=vmem_limit,
        ),
    )(patches, w_bd, b_row)

    # ---- glue: unpack + single parity-interleave transpose (kept in bf16) ------------
    out = out[:total_rows].reshape(N, npix_pad, Ndim)[:, :Npix, :]
    out = out.reshape(N, Ho, Wo, 2, 2, Cout)            # (n, a, b, p, q, co)
    out = jnp.transpose(out, (0, 5, 1, 3, 2, 4))        # (n, co, a, p, b, q)
    out = out.reshape(N, Cout, 2 * Ho, 2 * Wo)
    return out.astype(jnp.float32)                      # cast to f32 only at the end


def _reference(x_nchw, weight, bias):
    """Direct (pure-JAX, f32) ConvTranspose2d(k=4, s=2, p=0) + ReLU."""
    N, Cin, H, W = x_nchw.shape
    Cout = weight.shape[1]
    out = jnp.zeros((N, Cout, 2 * H + 2, 2 * W + 2), dtype=jnp.float32)
    for kh in range(4):
        for kw in range(4):
            contrib = jnp.einsum("nihw,io->nohw", x_nchw, weight[:, :, kh, kw])
            out = out.at[:, :, kh:kh + 2 * H:2, kw:kw + 2 * W:2].add(contrib)
    out = out + bias[None, :, None, None]
    return jnp.maximum(out, 0.0)


if __name__ == "__main__":
    key = jax.random.PRNGKey(0)
    k1, k2, k3 = jax.random.split(key, 3)

    N, Cin, Cout, H, W = 2, 4, 8, 16, 16

    x = jax.random.normal(k1, (N, Cin, H, W), dtype=jnp.float32)
    # Deterministic parameter init (shapes match nn.ConvTranspose2d(Cin, Cout, 4)).
    bound = 1.0 / jnp.sqrt(jnp.float32(Cin * 4 * 4))
    weight = jax.random.uniform(k2, (Cin, Cout, 4, 4), jnp.float32, -bound, bound)
    bias = jax.random.uniform(k3, (Cout,), jnp.float32, -bound, bound)

    out = jax.block_until_ready(basic_block_transposed(x, weight, bias))
    ref = _reference(x, weight, bias)

    assert out.shape == (N, Cout, 2 * H + 2, 2 * W + 2), out.shape
    # bf16 compute + bf16 store (f32 accumulation) -> loosened tolerance vs f32 reference.
    assert jnp.allclose(out, ref, atol=2e-2, rtol=2e-2), float(jnp.max(jnp.abs(out - ref)))
    print("KERNEL_OK")
</pallas_src>

<mosaic_0001>
module attributes {stable_mosaic.version = 11 : i64} {
  func.func @_convt_fused_kernel(%arg0: i32, %arg1: memref<48x64xbf16, #tpu.memory_space<vmem>>, %arg2: memref<64x128xbf16, #tpu.memory_space<vmem>>, %arg3: memref<1x128xf32, #tpu.memory_space<vmem>>, %arg4: memref<48x128xbf16, #tpu.memory_space<vmem>>) attributes {dimension_semantics = [#tpu.dimension_semantics<parallel>], iteration_bounds = array<i64: 4>, scalar_prefetch = 0 : i64, scratch_operands = 0 : i64, tpu.core_type = #tpu.core_type<tc>, window_params = [{transform_indices = @transform_0, window_bounds = array<i64: 48, 64>}, {pipeline_mode = #tpu.pipeline_mode<synchronous>, transform_indices = @transform_1, window_bounds = array<i64: 64, 128>}, {pipeline_mode = #tpu.pipeline_mode<synchronous>, transform_indices = @transform_2, window_bounds = array<i64: 1, 128>}, {transform_indices = @transform_3, window_bounds = array<i64: 48, 128>}]} {
    %c0 = arith.constant 0 : index
    %c0_0 = arith.constant 0 : index
    %0 = vector.load %arg1[%c0, %c0_0] : memref<48x64xbf16, #tpu.memory_space<vmem>>, vector<48x64xbf16>
    %c0_1 = arith.constant 0 : index
    %c0_2 = arith.constant 0 : index
    %1 = vector.load %arg2[%c0_1, %c0_2] : memref<64x128xbf16, #tpu.memory_space<vmem>>, vector<64x128xbf16>
    %cst = arith.constant dense<0.000000e+00> : vector<48x128xf32>
    %2 = tpu.matmul %0, %1, %cst {dimension_numbers = #tpu.dot_dimension_numbers<[1], [0], [0], [1], [0, 0, 1, 1], [], []>} : vector<48x64xbf16>, vector<64x128xbf16>, vector<48x128xf32> -> vector<48x128xf32>
    %c0_3 = arith.constant 0 : index
    %c0_4 = arith.constant 0 : index
    %3 = vector.load %arg3[%c0_3, %c0_4] : memref<1x128xf32, #tpu.memory_space<vmem>>, vector<1x128xf32>
    %4 = vector.broadcast %3 : vector<1x128xf32> to vector<48x128xf32>
    %5 = arith.addf %2, %4 : vector<48x128xf32>
    %cst_5 = arith.constant 0.000000e+00 : f32
    %6 = vector.broadcast %cst_5 : f32 to vector<48x128xf32>
    %7 = arith.maximumf %5, %6 : vector<48x128xf32>
    %8 = arith.truncf %7 : vector<48x128xf32> to vector<48x128xbf16>
    %c0_6 = arith.constant 0 : index
    %c0_7 = arith.constant 0 : index
    %9 = vector.load %arg4[%c0_6, %c0_7] : memref<48x128xbf16, #tpu.memory_space<vmem>>, vector<48x128xbf16>
    tpu.vector_store %arg4[%c0_6, %c0_7], %8 {strides = array<i32>} : memref<48x128xbf16, #tpu.memory_space<vmem>>, vector<48x128xbf16>,
    return
  }
  func.func @transform_0(%arg0: i32) -> (i32, i32) {
    %c0_i32 = arith.constant 0 : i32
    %c0_i32_0 = arith.constant 0 : i32
    return %arg0, %c0_i32 : i32, i32
  }
  func.func @transform_1(%arg0: i32) -> (i32, i32) {
    %c0_i32 = arith.constant 0 : i32
    %c0_i32_0 = arith.constant 0 : i32
    %c0_i32_1 = arith.constant 0 : i32
    return %c0_i32, %c0_i32_0 : i32, i32
  }
  func.func @transform_2(%arg0: i32) -> (i32, i32) {
    %c0_i32 = arith.constant 0 : i32
    %c0_i32_0 = arith.constant 0 : i32
    %c0_i32_1 = arith.constant 0 : i32
    return %c0_i32, %c0_i32_0 : i32, i32
  }
  func.func @transform_3(%arg0: i32) -> (i32, i32) {
    %c0_i32 = arith.constant 0 : i32
    %c0_i32_0 = arith.constant 0 : i32
    return %arg0, %c0_i32 : i32, i32
  }
}

</mosaic_0001>

<llo_original>
// kernel: tile.8
$region0: #{tile.8}
  #allocation2 [shape = 's32[1]{0}', space=sflag, size = 0x4, scoped, tag = 'scoped memory for tile.8']
  %s0 = inlined_call_operand.hbm [shape: f32[8], index: 0, kind: input, shape index: {}]
  %s1 = inlined_call_operand.vmem [shape: f32[16,8], index: 1, kind: output, shape index: {}]
  $region1: #{tile.8} parent=0
    #allocation0 [shape = 'u8[512]{0}', space=vmem, size = 0x400, scoped, tag = 'operand span for operand 0']
    #allocation1 [shape = 's32[1]{0}', space=sflag, size = 0x4, scoped, tag = 'scoped memory for tile.8']
    %2 = vsyncpa [#allocation1], 0
    // Predicated region
    $region2: #{tile.8} parent=1 // pred_check
      _
    $region3: #{tile.8} parent=1 // pred_check_branch
      %4 = sbr.rel (0) target = $region5
    $region4: #{tile.8} parent=1 // pred_region
      %s6 = ssub.s32 16, 16
      %7 = vsyncadd [#allocation1], %s6
      %s9 = sshll.u32 [#allocation0], 4
      %s10 = int_to_ptr.vmem [resolvable:$true] %s9
      %12 = dma.hbm_to_vmem [thread:$0]  %s0, 16, %s10, [#allocation1]
    $region5: #{tile.8} parent=1 // pred_fallthru
      _
    // Predicated region
    $region6: #{tile.8} parent=1 // pred_check
      _
    $region7: #{tile.8} parent=1 // pred_check_branch
      %14 = sbr.rel (0) target = $region9
    $region8: #{tile.8} parent=1 // pred_region
      %15 = dma.done [#allocation1], 16
    $region9: #{tile.8} parent=1 // pred_fallthru
      _
    %v16 = vld [vmem:[#allocation0] ss:$0 sm:$0xff]
    %17 = vst [vmem:[%s1] sm:$0xff] %v16
    %s18 = scalar_lea.vmem %s1, 8
    %19 = vst [vmem:[%s18] sm:$0xff] %v16
    %20 = vsyncpa [#allocation1], 1

// kernel: tile.9
$region0: #{tile.9}
  %s0 = inlined_call_operand.vmem [shape: f32[16,8], index: 0, kind: input, shape index: {}]
  %s1 = inlined_call_operand.vmem [shape: f32[1,128], index: 1, kind: output, shape index: {}]
  $region1: #{tile.9} parent=0
    #allocation0 [shape = 'u8[4096]{0}', space=vmem, size = 0x1000, scoped, tag = 'scoped mem for output reshape']
    %v2 = vld [vmem:[%s0] sm:$0x1]
    %vm3 = vcmask 64512
    %4 = vst.msk [vmem:[#allocation0] sm:$0x1] %vm3, %v2
    %s5 = scalar_lea.vmem %s0, 15
    %v6 = vld [vmem:[%s5] sm:$0x1]
    %7 = vrot.lane.b32.xlu0 %v6, 120
    %v8 = vpop.permute.xlu0 %7
    %vm9 = vcmask 1048512
    %10 = vst.msk [vmem:[#allocation0] sm:$0x1] %vm9, %v8
    %s11 = scalar_lea.vmem %s0, 14
    %v12 = vld [vmem:[%s11] sm:$0x1]
    %13 = vrot.lane.b32.xlu0 %v12, 112
    %v14 = vpop.permute.xlu0 %13
    %vm15 = vcmask 982912
    %16 = vst.msk [vmem:[#allocation0] sm:$0x1] %vm15, %v14
    %s17 = scalar_lea.vmem %s0, 13
    %v18 = vld [vmem:[%s17] sm:$0x1]
    %19 = vrot.lane.b32.xlu0 %v18, 104
    %v20 = vpop.permute.xlu0 %19
    %vm21 = vcmask 917312
    %22 = vst.msk [vmem:[#allocation0] sm:$0x1] %vm21, %v20
    %s23 = scalar_lea.vmem %s0, 12
    %v24 = vld [vmem:[%s23] sm:$0x1]
    %25 = vrot.lane.b32.xlu0 %v24, 96
    %v26 = vpop.permute.xlu0 %25
    %vm27 = vcmask 851712
    %28 = vst.msk [vmem:[#allocation0] sm:$0x1] %vm27, %v26
    %s29 = scalar_lea.vmem %s0, 11
    %v30 = vld [vmem:[%s29] sm:$0x1]
    %31 = vrot.lane.b32.xlu0 %v30, 88
    %v32 = vpop.permute.xlu0 %31
    %vm33 = vcmask 786112
    %34 = vst.msk [vmem:[#allocation0] sm:$0x1] %vm33, %v32
    %s35 = scalar_lea.vmem %s0, 10
    %v36 = vld [vmem:[%s35] sm:$0x1]
    %37 = vrot.lane.b32.xlu0 %v36, 80
    %v38 = vpop.permute.xlu0 %37
    %vm39 = vcmask 720512
    %40 = vst.msk [vmem:[#allocation0] sm:$0x1] %vm39, %v38
    %s41 = scalar_lea.vmem %s0, 9
    %v42 = vld [vmem:[%s41] sm:$0x1]
    %43 = vrot.lane.b32.xlu0 %v42, 72
    %v44 = vpop.permute.xlu0 %43
    %vm45 = vcmask 654912
    %46 = vst.msk [vmem:[#allocation0] sm:$0x1] %vm45, %v44
    %s47 = scalar_lea.vmem %s0, 8
    %v48 = vld [vmem:[%s47] sm:$0x1]
    %49 = vrot.lane.b32.xlu0 %v48, 64
    %v50 = vpop.permute.xlu0 %49
    %vm51 = vcmask 589312
    %52 = vst.msk [vmem:[#allocation0] sm:$0x1] %vm51, %v50
    %s53 = scalar_lea.vmem %s0, 7
    %v54 = vld [vmem:[%s53] sm:$0x1]
    %55 = vrot.lane.b32.xlu0 %v54, 56
    %v56 = vpop.permute.xlu0 %55
    %vm57 = vcmask 523712
    %58 = vst.msk [vmem:[#allocation0] sm:$0x1] %vm57, %v56
    %s59 = scalar_lea.vmem %s0, 6
    %v60 = vld [vmem:[%s59] sm:$0x1]
    %61 = vrot.lane.b32.xlu0 %v60, 48
    %v62 = vpop.permute.xlu0 %61
    %vm63 = vcmask 458112
    %64 = vst.msk [vmem:[#allocation0] sm:$0x1] %vm63, %v62
    %s65 = scalar_lea.vmem %s0, 5
    %v66 = vld [vmem:[%s65] sm:$0x1]
    %67 = vrot.lane.b32.xlu0 %v66, 40
    %v68 = vpop.permute.xlu0 %67
    %vm69 = vcmask 392512
    %70 = vst.msk [vmem:[#allocation0] sm:$0x1] %vm69, %v68
    %s71 = scalar_lea.vmem %s0, 4
    %v72 = vld [vmem:[%s71] sm:$0x1]
    %73 = vrot.lane.b32.xlu0 %v72, 32
    %v74 = vpop.permute.xlu0 %73
    %vm75 = vcmask 326912
    %76 = vst.msk [vmem:[#allocation0] sm:$0x1] %vm75, %v74
    %s77 = scalar_lea.vmem %s0, 3
    %v78 = vld [vmem:[%s77] sm:$0x1]
    %79 = vrot.lane.b32.xlu0 %v78, 24
    %v80 = vpop.permute.xlu0 %79
    %vm81 = vcmask 261312
    %82 = vst.msk [vmem:[#allocation0] sm:$0x1] %vm81, %v80
    %s83 = scalar_lea.vmem %s0, 2
    %v84 = vld [vmem:[%s83] sm:$0x1]
    %85 = vrot.lane.b32.xlu0 %v84, 16
    %v86 = vpop.permute.xlu0 %85
    %vm87 = vcmask 195712
    %88 = vst.msk [vmem:[#allocation0] sm:$0x1] %vm87, %v86
    %s89 = scalar_lea.vmem %s0, 1
    %v90 = vld [vmem:[%s89] sm:$0x1]
    %91 = vrot.lane.b32.xlu0 %v90, 8
    %v92 = vpop.permute.xlu0 %91
    %vm93 = vcmask 130112
    %94 = vst.msk [vmem:[#allocation0] sm:$0x1] %vm93, %v92
    %s96 = sshll.u32 1, 1
    %s97 = ssub.s32 %s96, 1
    %v99 = vld [vmem:[#allocation0] sm:%s97]
    %s100 = sshll.u32 1, 1
    %s101 = ssub.s32 %s100, 1
    %102 = vst [vmem:[%s1] sm:%s101] %v99

// kernel: mul.4
$region0: #{mul.4}
  %s0 = inlined_call_operand.vmem [shape: f32[2,2,4,2,2,8], index: 0, kind: input, shape index: {}]
  %s1 = inlined_call_operand.vmem [shape: f32[16,32], index: 1, kind: output, shape index: {}]
  $region1: #{mul.4} parent=0
    #allocation0 [shape = 'u8[131072]{0}', space=vmem, size = 0x20000, scoped, tag = 'scoped mem for input reshape']
    %s3 = sshll.u32 1, 2
    %s4 = ssub.s32 %s3, 1
    %s5 = smul.addr 2, 31
    %s6 = scalar_lea.vmem %s0, %s5
    %v7 = vld [vmem:[%s6] sm:%s4]
    %s8 = scalar_lea.vmem [#allocation0], 248
    %9 = vst [vmem:[%s8] sm:%s4] %v7
    %s10 = smul.addr 2, 30
    %s11 = scalar_lea.vmem %s0, %s10
    %v12 = vld [vmem:[%s11] sm:%s4]
    %s13 = scalar_lea.vmem [#allocation0], 240
    %14 = vst [vmem:[%s13] sm:%s4] %v12
    %s15 = smul.addr 2, 29
    %s16 = scalar_lea.vmem %s0, %s15
    %v17 = vld [vmem:[%s16] sm:%s4]
    %s18 = scalar_lea.vmem [#allocation0], 232
    %19 = vst [vmem:[%s18] sm:%s4] %v17
    %s20 = smul.addr 2, 28
    %s21 = scalar_lea.vmem %s0, %s20
    %v22 = vld [vmem:[%s21] sm:%s4]
    %s23 = scalar_lea.vmem [#allocation0], 224
    %24 = vst [vmem:[%s23] sm:%s4] %v22
    %s25 = smul.addr 2, 27
    %s26 = scalar_lea.vmem %s0, %s25
    %v27 = vld [vmem:[%s26] sm:%s4]
    %s28 = scalar_lea.vmem [#allocation0], 216
    %29 = vst [vmem:[%s28] sm:%s4] %v27
    %s30 = smul.addr 2, 26
    %s31 = scalar_lea.vmem %s0, %s30
    %v32 = vld [vmem:[%s31] sm:%s4]
    %s33 = scalar_lea.vmem [#allocation0], 208
    %34 = vst [vmem:[%s33] sm:%s4] %v32
    %s35 = smul.addr 2, 25
    %s36 = scalar_lea.vmem %s0, %s35
    %v37 = vld [vmem:[%s36] sm:%s4]
    %s38 = scalar_lea.vmem [#allocation0], 200
    %39 = vst [vmem:[%s38] sm:%s4] %v37
    %s40 = smul.addr 2, 24
    %s41 = scalar_lea.vmem %s0, %s40
    %v42 = vld [vmem:[%s41] sm:%s4]
    %s43 = scalar_lea.vmem [#allocation0], 192
    %44 = vst [vmem:[%s43] sm:%s4] %v42
    %s45 = smul.addr 2, 23
    %s46 = scalar_lea.vmem %s0, %s45
    %v47 = vld [vmem:[%s46] sm:%s4]
    %s48 = scalar_lea.vmem [#allocation0], 184
    %49 = vst [vmem:[%s48] sm:%s4] %v47
    %s50 = smul.addr 2, 22
    %s51 = scalar_lea.vmem %s0, %s50
    %v52 = vld [vmem:[%s51] sm:%s4]
    %s53 = scalar_lea.vmem [#allocation0], 176
    %54 = vst [vmem:[%s53] sm:%s4] %v52
    %s55 = smul.addr 2, 21
    %s56 = scalar_lea.vmem %s0, %s55
    %v57 = vld [vmem:[%s56] sm:%s4]
    %s58 = scalar_lea.vmem [#allocation0], 168
    %59 = vst [vmem:[%s58] sm:%s4] %v57
    %s60 = smul.addr 2, 20
    %s61 = scalar_lea.vmem %s0, %s60
    %v62 = vld [vmem:[%s61] sm:%s4]
    %s63 = scalar_lea.vmem [#allocation0], 160
    %64 = vst [vmem:[%s63] sm:%s4] %v62
    %s65 = smul.addr 2, 19
    %s66 = scalar_lea.vmem %s0, %s65
    %v67 = vld [vmem:[%s66] sm:%s4]
    %s68 = scalar_lea.vmem [#allocation0], 152
    %69 = vst [vmem:[%s68] sm:%s4] %v67
    %s70 = smul.addr 2, 18
    %s71 = scalar_lea.vmem %s0, %s70
    %v72 = vld [vmem:[%s71] sm:%s4]
    %s73 = scalar_lea.vmem [#allocation0], 144
    %74 = vst [vmem:[%s73] sm:%s4] %v72
    %s75 = smul.addr 2, 17
    %s76 = scalar_lea.vmem %s0, %s75
    %v77 = vld [vmem:[%s76] sm:%s4]
    %s78 = scalar_lea.vmem [#allocation0], 136
    %79 = vst [vmem:[%s78] sm:%s4] %v77
    %s80 = smul.addr 2, 16
    %s81 = scalar_lea.vmem %s0, %s80
    %v82 = vld [vmem:[%s81] sm:%s4]
    %s83 = scalar_lea.vmem [#allocation0], 128
    %84 = vst [vmem:[%s83] sm:%s4] %v82
    %s85 = smul.addr 2, 15
    %s86 = scalar_lea.vmem %s0, %s85
    %v87 = vld [vmem:[%s86] sm:%s4]
    %s88 = scalar_lea.vmem [#allocation0], 120
    %89 = vst [vmem:[%s88] sm:%s4] %v87
    %s90 = smul.addr 2, 14
    %s91 = scalar_lea.vmem %s0, %s90
    %v92 = vld [vmem:[%s91] sm:%s4]
    %s93 = scalar_lea.vmem [#allocation0], 112
    %94 = vst [vmem:[%s93] sm:%s4] %v92
    %s95 = smul.addr 2, 13
    %s96 = scalar_lea.vmem %s0, %s95
    %v97 = vld [vmem:[%s96] sm:%s4]
    %s98 = scalar_lea.vmem [#allocation0], 104
    %99 = vst [vmem:[%s98] sm:%s4] %v97
    %s100 = smul.addr 2, 12
    %s101 = scalar_lea.vmem %s0, %s100
    %v102 = vld [vmem:[%s101] sm:%s4]
    %s103 = scalar_lea.vmem [#allocation0], 96
    %104 = vst [vmem:[%s103] sm:%s4] %v102
    %s105 = smul.addr 2, 11
    %s106 = scalar_lea.vmem %s0, %s105
    %v107 = vld [vmem:[%s106] sm:%s4]
    %s108 = scalar_lea.vmem [#allocation0], 88
    %109 = vst [vmem:[%s108] sm:%s4] %v107
    %s110 = smul.addr 2, 10
    %s111 = scalar_lea.vmem %s0, %s110
    %v112 = vld [vmem:[%s111] sm:%s4]
    %s113 = scalar_lea.vmem [#allocation0], 80
    %114 = vst [vmem:[%s113] sm:%s4] %v112
    %s115 = smul.addr 2, 9
    %s116 = scalar_lea.vmem %s0, %s115
    %v117 = vld [vmem:[%s116] sm:%s4]
    %s118 = scalar_lea.vmem [#allocation0], 72
    %119 = vst [vmem:[%s118] sm:%s4] %v117
    %s120 = smul.addr 2, 8
    %s121 = scalar_lea.vmem %s0, %s120
    %v122 = vld [vmem:[%s121] sm:%s4]
    %s123 = scalar_lea.vmem [#allocation0], 64
    %124 = vst [vmem:[%s123] sm:%s4] %v122
    %s125 = smul.addr 2, 7
    %s126 = scalar_lea.vmem %s0, %s125
    %v127 = vld [vmem:[%s126] sm:%s4]
    %s128 = scalar_lea.vmem [#allocation0], 56
    %129 = vst [vmem:[%s128] sm:%s4] %v127
    %s130 = smul.addr 2, 6
    %s131 = scalar_lea.vmem %s0, %s130
    %v132 = vld [vmem:[%s131] sm:%s4]
    %s133 = scalar_lea.vmem [#allocation0], 48
    %134 = vst [vmem:[%s133] sm:%s4] %v132
    %s135 = smul.addr 2, 5
    %s136 = scalar_lea.vmem %s0, %s135
    %v137 = vld [vmem:[%s136] sm:%s4]
    %s138 = scalar_lea.vmem [#allocation0], 40
    %139 = vst [vmem:[%s138] sm:%s4] %v137
    %s140 = smul.addr 2, 4
    %s141 = scalar_lea.vmem %s0, %s140
    %v142 = vld [vmem:[%s141] sm:%s4]
    %s143 = scalar_lea.vmem [#allocation0], 32
    %144 = vst [vmem:[%s143] sm:%s4] %v142
    %s145 = smul.addr 2, 3
    %s146 = scalar_lea.vmem %s0, %s145
    %v147 = vld [vmem:[%s146] sm:%s4]
    %s148 = scalar_lea.vmem [#allocation0], 24
    %149 = vst [vmem:[%s148] sm:%s4] %v147
    %s150 = smul.addr 2, 2
    %s151 = scalar_lea.vmem %s0, %s150
    %v152 = vld [vmem:[%s151] sm:%s4]
    %s153 = scalar_lea.vmem [#allocation0], 16
    %154 = vst [vmem:[%s153] sm:%s4] %v152
    %s155 = scalar_lea.vmem %s0, 2
    %v156 = vld [vmem:[%s155] sm:%s4]
    %s157 = scalar_lea.vmem [#allocation0], 8
    %158 = vst [vmem:[%s157] sm:%s4] %v156
    %v159 = vld [vmem:[%s0] sm:%s4]
    %160 = vst [vmem:[#allocation0] sm:%s4] %v159
    %s161 = smov 3
    %v162 = vld [vmem:[#allocation0] ss:$16 sm:%s161]
    %s163 = smov 12
    %v164 = vld [vmem:[#allocation0] ss:$16 sm:%s163]
    %vm165 = vcmask 1043458
    %v166 = vsel %vm165, %v164, %v162
    %s167 = smov 48
    %v168 = vld [vmem:[#allocation0] ss:$16 sm:%s167]
    %vm169 = vcmask 1045508
    %v170 = vsel %vm169, %v168, %v166
    %s171 = smov 192
    %v172 = vld [vmem:[#allocation0] ss:$16 sm:%s171]
    %vm173 = vcmask 1047558
    %v174 = vsel %vm173, %v172, %v170
    %vm175 = vcmask 64512
    %176 = vst.msk [vmem:[%s1] sm:$0xff] %vm175, %v174
    %s177 = scalar_lea.vmem [#allocation0], 128
    %s178 = smov 3
    %v179 = vld [vmem:[%s177] ss:$16 sm:%s178]
    %s180 = scalar_lea.vmem [#allocation0], 128
    %s181 = smov 12
    %v182 = vld [vmem:[%s180] ss:$16 sm:%s181]
    %vm183 = vcmask 1043458
    %v184 = vsel %vm183, %v182, %v179
    %s185 = scalar_lea.vmem [#allocation0], 128
    %s186 = smov 48
    %v187 = vld [vmem:[%s185] ss:$16 sm:%s186]
    %vm188 = vcmask 1045508
    %v189 = vsel %vm188, %v187, %v184
    %s190 = scalar_lea.vmem [#allocation0], 128
    %s191 = smov 192
    %v192 = vld [vmem:[%s190] ss:$16 sm:%s191]
    %vm193 = vcmask 1047558
    %v194 = vsel %vm193, %v192, %v189
    %vm195 = vcmask 64512
    %s196 = scalar_lea.vmem %s1, 8
    %197 = vst.msk [vmem:[%s196] sm:$0xff] %vm195, %v194
    %s198 = scalar_lea.vmem [#allocation0], 9
    %s199 = smov 3
    %v200 = vld [vmem:[%s198] ss:$16 sm:%s199]
    %s201 = scalar_lea.vmem [#allocation0], 9
    %s202 = smov 12
    %v203 = vld [vmem:[%s201] ss:$16 sm:%s202]
    %vm204 = vcmask 1043458
    %v205 = vsel %vm204, %v203, %v200
    %s206 = scalar_lea.vmem [#allocation0], 9
    %s207 = smov 48
    %v208 = vld [vmem:[%s206] ss:$16 sm:%s207]
    %vm209 = vcmask 1045508
    %v210 = vsel %vm209, %v208, %v205
    %s211 = scalar_lea.vmem [#allocation0], 9
    %s212 = smov 192
    %v213 = vld [vmem:[%s211] ss:$16 sm:%s212]
    %vm214 = vcmask 1047558
    %v215 = vsel %vm214, %v213, %v210
    %216 = vrot.lane.b32.xlu0 %v215, 24
    %v217 = vpop.permute.xlu0 %216
    %vm218 = vcmask 261312
    %219 = vst.msk [vmem:[%s1] sm:$0xff] %vm218, %v217
    %s220 = scalar_lea.vmem [#allocation0], 137
    %s221 = smov 3
    %v222 = vld [vmem:[%s220] ss:$16 sm:%s221]
    %s223 = scalar_lea.vmem [#allocation0], 137
    %s224 = smov 12
    %v225 = vld [vmem:[%s223] ss:$16 sm:%s224]
    %vm226 = vcmask 1043458
    %v227 = vsel %vm226, %v225, %v222
    %s228 = scalar_lea.vmem [#allocation0], 137
    %s229 = smov 48
    %v230 = vld [vmem:[%s228] ss:$16 sm:%s229]
    %vm231 = vcmask 1045508
    %v232 = vsel %vm231, %v230, %v227
    %s233 = scalar_lea.vmem [#allocation0], 137
    %s234 = smov 192
    %v235 = vld [vmem:[%s233] ss:$16 sm:%s234]
    %vm236 = vcmask 1047558
    %v237 = vsel %vm236, %v235, %v232
    %238 = vrot.lane.b32.xlu0 %v237, 24
    %v239 = vpop.permute.xlu0 %238
    %vm240 = vcmask 261312
    %s241 = scalar_lea.vmem %s1, 8
    %242 = vst.msk [vmem:[%s241] sm:$0xff] %vm240, %v239
    %s243 = scalar_lea.vmem [#allocation0], 8
    %s244 = smov 3
    %v245 = vld [vmem:[%s243] ss:$16 sm:%s244]
    %s246 = scalar_lea.vmem [#allocation0], 8
    %s247 = smov 12
    %v248 = vld [vmem:[%s246] ss:$16 sm:%s247]
    %vm249 = vcmask 1043458
    %v250 = vsel %vm249, %v248, %v245
    %s251 = scalar_lea.vmem [#allocation0], 8
    %s252 = smov 48
    %v253 = vld [vmem:[%s251] ss:$16 sm:%s252]
    %vm254 = vcmask 1045508
    %v255 = vsel %vm254, %v253, %v250
    %s256 = scalar_lea.vmem [#allocation0], 8
    %s257 = smov 192
    %v258 = vld [vmem:[%s256] ss:$16 sm:%s257]
    %vm259 = vcmask 1047558
    %v260 = vsel %vm259, %v258, %v255
    %261 = vrot.lane.b32.xlu0 %v260, 16
    %v262 = vpop.permute.xlu0 %261
    %vm263 = vcmask 195712
    %264 = vst.msk [vmem:[%s1] sm:$0xff] %vm263, %v262
    %s265 = scalar_lea.vmem [#allocation0], 136
    %s266 = smov 3
    %v267 = vld [vmem:[%s265] ss:$16 sm:%s266]
    %s268 = scalar_lea.vmem [#allocation0], 136
    %s269 = smov 12
    %v270 = vld [vmem:[%s268] ss:$16 sm:%s269]
    %vm271 = vcmask 1043458
    %v272 = vsel %vm271, %v270, %v267
    %s273 = scalar_lea.vmem [#allocation0], 136
    %s274 = smov 48
    %v275 = vld [vmem:[%s273] ss:$16 sm:%s274]
    %vm276 = vcmask 1045508
    %v277 = vsel %vm276, %v275, %v272
    %s278 = scalar_lea.vmem [#allocation0], 136
    %s279 = smov 192
    %v280 = vld [vmem:[%s278] ss:$16 sm:%s279]
    %vm281 = vcmask 1047558
    %v282 = vsel %vm281, %v280, %v277
    %283 = vrot.lane.b32.xlu0 %v282, 16
    %v284 = vpop.permute.xlu0 %283
    %vm285 = vcmask 195712
    %s286 = scalar_lea.vmem %s1, 8
    %287 = vst.msk [vmem:[%s286] sm:$0xff] %vm285, %v284
    %s288 = scalar_lea.vmem [#allocation0], 1
    %s289 = smov 3
    %v290 = vld [vmem:[%s288] ss:$16 sm:%s289]
    %s291 = scalar_lea.vmem [#allocation0], 1
    %s292 = smov 12
    %v293 = vld [vmem:[%s291] ss:$16 sm:%s292]
    %vm294 = vcmask 1043458
    %v295 = vsel %vm294, %v293, %v290
    %s296 = scalar_lea.vmem [#allocation0], 1
    %s297 = smov 48
    %v298 = vld [vmem:[%s296] ss:$16 sm:%s297]
    %vm299 = vcmask 1045508
    %v300 = vsel %vm299, %v298, %v295
    %s301 = scalar_lea.vmem [#allocation0], 1
    %s302 = smov 192
    %v303 = vld [vmem:[%s301] ss:$16 sm:%s302]
    %vm304 = vcmask 1047558
    %v305 = vsel %vm304, %v303, %v300
    %306 = vrot.lane.b32.xlu0 %v305, 8
    %v307 = vpop.permute.xlu0 %306
    %vm308 = vcmask 130112
    %309 = vst.msk [vmem:[%s1] sm:$0xff] %vm308, %v307
    %s310 = scalar_lea.vmem [#allocation0], 129
    %s311 = smov 3
    %v312 = vld [vmem:[%s310] ss:$16 sm:%s311]
    %s313 = scalar_lea.vmem [#allocation0], 129
    %s314 = smov 12
    %v315 = vld [vmem:[%s313] ss:$16 sm:%s314]
    %vm316 = vcmask 1043458
    %v317 = vsel %vm316, %v315, %v312
    %s318 = scalar_lea.vmem [#allocation0], 129
    %s319 = smov 48
    %v320 = vld [vmem:[%s318] ss:$16 sm:%s319]
    %vm321 = vcmask 1045508
    %v322 = vsel %vm321, %v320, %v317
    %s323 = scalar_lea.vmem [#allocation0], 129
    %s324 = smov 192
    %v325 = vld [vmem:[%s323] ss:$16 sm:%s324]
    %vm326 = vcmask 1047558
    %v327 = vsel %vm326, %v325, %v322
    %328 = vrot.lane.b32.xlu0 %v327, 8
    %v329 = vpop.permute.xlu0 %328
    %vm330 = vcmask 130112
    %s331 = scalar_lea.vmem %s1, 8
    %332 = vst.msk [vmem:[%s331] sm:$0xff] %vm330, %v329

// kernel: basic_block_transposed.1
$region0: #{basic_block_transposed.1}
  #allocation0 [shape = 'u32[]', space=smem, size = 0x4, offset = 0x4, fixed_abs, tag = 'smem constant byte address 0x4 - core index']
  #allocation1 [shape = 'u32[144,128]{1,0:T(1,128)}', space=vmem, size = 0x12000, scoped, tag = 'internal scratch']
  %s0 = inlined_call_operand.vmem [shape: bf16[192,64], index: 0, kind: input, shape index: {}]
  %s1 = inlined_call_operand.vmem [shape: bf16[64,128], index: 1, kind: input, shape index: {}]
  %s2 = inlined_call_operand.vmem [shape: f32[1,128], index: 2, kind: input, shape index: {}]
  %s3 = inlined_call_operand.vmem [shape: bf16[192,128], index: 3, kind: output, shape index: {}]
  %s4 = sld [smem:[#allocation0]]
  $region45: #{basic_block_transposed.1} parent=0
    _
  %s6 = ssub.s32 1, %s4
  %s7 = scalar_select 0, %s6, %s4
  loop: start=0, step=1, limit=6
  $region2: #{basic_block_transposed.1} parent=0 // loop_pre_header
    _
  $region3: #{basic_block_transposed.1} parent=0 // loop_header
    %s9 = sphi 0, %s13
    %p10 = scmp.ge.s32.totalorder %s9, 6
    %s19 = sphi 0, %s21
    %s22 = sphi 0, %s19
    %s23 = sphi 0, %s22
    %s39 = sphi 0, %s23
    %s43 = sphi 0, %s43
    %s45 = sphi 0, %s43
    %s46 = sphi 0, %s45
    %s60 = sphi 0, %s46
    %s64 = sphi 0, %s64
    %s66 = sphi 0, %s64
    %s67 = sphi 0, %s66
    %s81 = sphi 0, %s67
    %s87 = sphi 0, %s89
    %s90 = sphi 0, %s87
    %s91 = sphi 0, %s90
    %s107 = sphi 0, %s91
  $region4: #{basic_block_transposed.1} parent=0 // loop_header_branch
    %12 = sbr.rel (%p10) target = $region8
  $region5: #{basic_block_transposed.1} parent=0 // loop_body
    %s14 = ssub.s32 %s9, 1
    %s15 = ssub.s32 %s9, 2
    %s16 = sadd.s32 %s9, 1
    %s17 = ssub.s32 %s9, %s16
    %p18 = scmp.eq.s32.totalorder %s17, 0
    %s20 = sadd.s32 %s19, 1
    %s21 = scalar_select %p18, %s19, %s20
    %p24 = pneg %p18
    %p25 = scmp.eq.s32.totalorder %s9, 3
    %p26 = por %p24, %p25
    %p27 = scmp.ne.s32.totalorder %s19, %s22
    %p28 = scmp.eq.s32.totalorder %s9, 0
    %p29 = por %p27, %p28
    %p30 = scmp.ne.s32.totalorder %s19, %s22
    %p31 = scmp.eq.s32.totalorder %s14, 3
    %p32 = por %p30, %p31
    %p33 = scmp.ne.s32.totalorder %s22, %s23
    %p34 = scmp.eq.s32.totalorder %s14, 0
    %p35 = por %p33, %p34
    %p36 = scmp.ne.s32.totalorder %s22, %s23
    %p37 = scmp.eq.s32.totalorder %s15, 3
    %p38 = por %p36, %p37
    %p40 = scmp.ne.s32.totalorder %s23, %s39
    %p41 = scmp.eq.s32.totalorder %s15, 0
    %p42 = por %p40, %p41
    %s44 = sadd.s32 %s43, 1
    %p47 = scmp.eq.s32.totalorder %s9, 3
    %p48 = scmp.ne.s32.totalorder %s43, %s45
    %p49 = scmp.eq.s32.totalorder %s9, 0
    %p50 = por %p48, %p49
    %p51 = scmp.ne.s32.totalorder %s43, %s45
    %p52 = scmp.eq.s32.totalorder %s14, 3
    %p53 = por %p51, %p52
    %p54 = scmp.ne.s32.totalorder %s45, %s46
    %p55 = scmp.eq.s32.totalorder %s14, 0
    %p56 = por %p54, %p55
    %p57 = scmp.ne.s32.totalorder %s45, %s46
    %p58 = scmp.eq.s32.totalorder %s15, 3
    %p59 = por %p57, %p58
    %p61 = scmp.ne.s32.totalorder %s46, %s60
    %p62 = scmp.eq.s32.totalorder %s15, 0
    %p63 = por %p61, %p62
    %s65 = sadd.s32 %s64, 1
    %p68 = scmp.eq.s32.totalorder %s9, 3
    %p69 = scmp.ne.s32.totalorder %s64, %s66
    %p70 = scmp.eq.s32.totalorder %s9, 0
    %p71 = por %p69, %p70
    %p72 = scmp.ne.s32.totalorder %s64, %s66
    %p73 = scmp.eq.s32.totalorder %s14, 3
    %p74 = por %p72, %p73
    %p75 = scmp.ne.s32.totalorder %s66, %s67
    %p76 = scmp.eq.s32.totalorder %s14, 0
    %p77 = por %p75, %p76
    %p78 = scmp.ne.s32.totalorder %s66, %s67
    %p79 = scmp.eq.s32.totalorder %s15, 3
    %p80 = por %p78, %p79
    %p82 = scmp.ne.s32.totalorder %s67, %s81
    %p83 = scmp.eq.s32.totalorder %s15, 0
    %p84 = por %p82, %p83
    %s85 = ssub.s32 %s9, %s16
    %p86 = scmp.eq.s32.totalorder %s85, 0
    %s88 = sadd.s32 %s87, 1
    %s89 = scalar_select %p86, %s87, %s88
    %p92 = pneg %p86
    %p93 = scmp.eq.s32.totalorder %s9, 3
    %p94 = por %p92, %p93
    %p95 = scmp.ne.s32.totalorder %s87, %s90
    %p96 = scmp.eq.s32.totalorder %s9, 0
    %p97 = por %p95, %p96
    %p98 = scmp.ne.s32.totalorder %s87, %s90
    %p99 = scmp.eq.s32.totalorder %s14, 3
    %p100 = por %p98, %p99
    %p101 = scmp.ne.s32.totalorder %s90, %s91
    %p102 = scmp.eq.s32.totalorder %s14, 0
    %p103 = por %p101, %p102
    %p104 = scmp.ne.s32.totalorder %s90, %s91
    %p105 = scmp.eq.s32.totalorder %s15, 3
    %p106 = por %p104, %p105
    %p108 = scmp.ne.s32.totalorder %s91, %s107
    %p109 = scmp.eq.s32.totalorder %s15, 0
    %p110 = por %p108, %p109
    %p111 = scmp.le.s32.totalorder 1, %s9
    %p112 = scmp.lt.s32.totalorder %s9, 5
    %p113 = pnand %p111, %p112
    %p114 = pneg %p113
    // Predicated region
    $region9: #{basic_block_transposed.1} parent=5 // pred_check
      _
    $region10: #{basic_block_transposed.1} parent=5 // pred_check_branch
      %116 = sbr.rel (%p113) target = $region12
    $region11: #{basic_block_transposed.1} parent=5 // pred_region
      %s117 = ssub.s32 %s9, 1
      // Predicated region
      $region13: #{basic_block_transposed.1} parent=11 // pred_check
        %p118 = pneg %p56
      $region14: #{basic_block_transposed.1} parent=11 // pred_check_branch
        %120 = sbr.rel (%p118) target = $region16
      $region15: #{basic_block_transposed.1} parent=11 // pred_region
        _
      $region16: #{basic_block_transposed.1} parent=11 // pred_fallthru
        _
      // Predicated region
      $region17: #{basic_block_transposed.1} parent=11 // pred_check
        %p121 = pneg %p77
      $region18: #{basic_block_transposed.1} parent=11 // pred_check_branch
        %123 = sbr.rel (%p121) target = $region20
      $region19: #{basic_block_transposed.1} parent=11 // pred_region
        _
      $region20: #{basic_block_transposed.1} parent=11 // pred_fallthru
        _
    $region12: #{basic_block_transposed.1} parent=5 // pred_fallthru
      _
    %p124 = scmp.lt.s32.totalorder %s9, 4
    // Predicated region
    $region21: #{basic_block_transposed.1} parent=5 // pred_check
      %p125 = pneg %p124
    $region22: #{basic_block_transposed.1} parent=5 // pred_check_branch
      %127 = sbr.rel (%p125) target = $region24
    $region23: #{basic_block_transposed.1} parent=5 // pred_region
      // Predicated region
      $region25: #{basic_block_transposed.1} parent=23 // pred_check
        %p128 = pneg %p29
      $region26: #{basic_block_transposed.1} parent=23 // pred_check_branch
        %130 = sbr.rel (%p128) target = $region28
      $region27: #{basic_block_transposed.1} parent=23 // pred_region
        %s131 = smul.u32 6, %s9
        %p132 = scmp.lt.s32.totalorder %s131, 23
        %s133 = scalar_select %p132, %s131, 23
        %s134 = smul.addr %s133, 4
        %s135 = scalar_lea.vmem %s0, %s134
        %s136 = smul.u32 6, %s9
      $region28: #{basic_block_transposed.1} parent=23 // pred_fallthru
        _
    $region24: #{basic_block_transposed.1} parent=5 // pred_fallthru
      _
    %p137 = scmp.le.s32.totalorder 1, %s9
    %p138 = scmp.lt.s32.totalorder %s9, 5
    %p139 = pnand %p137, %p138
    %p140 = pneg %p139
    // Predicated region
    $region29: #{basic_block_transposed.1} parent=5 // pred_check
      _
    $region30: #{basic_block_transposed.1} parent=5 // pred_check_branch
      %142 = sbr.rel (%p139) target = $region32
    $region31: #{basic_block_transposed.1} parent=5 // pred_region
      %s143 = ssub.s32 %s9, 1
      %s144 = smul.u32 6, %s14
      %p145 = scmp.lt.s32.totalorder %s144, 23
      %s146 = scalar_select %p145, %s144, 23
      %s147 = smul.addr %s146, 4
      %s148 = scalar_lea.vmem %s0, %s147
      %p149 = pneg %p35
      %p150 = pneg %p32
      %p151 = pneg %p56
      %p152 = pneg %p53
      %p153 = pneg %p77
      %p154 = pneg %p74
      %p155 = pneg %p103
      %p156 = pneg %p100
      %s157 = smul.u32 6, %s14
      %p158 = scmp.lt.s32.totalorder %s157, 23
      %s159 = scalar_select %p158, %s157, 23
      %s160 = smul.addr %s159, 4
      %s161 = scalar_lea.vmem %s3, %s160
      %s162 = smul.u32 6, %s14
      %p163 = scmp.lt.s32.totalorder %s162, 23
      %s164 = scalar_select %p163, %s162, 23
      %s165 = smul.addr %s164, 4
      %s166 = scalar_lea.vmem %s0, %s165
      %s167 = smul.u32 6, %s14
      %s168 = smul.u32 6, %s14
      %p169 = scmp.lt.s32.totalorder %s168, 23
      %s170 = scalar_select %p169, %s168, 23
      %s171 = smul.addr %s170, 4
      %s172 = scalar_lea.vmem %s3, %s171
      %s173 = smul.u32 6, %s14
      %v175 = vld [vmem:[%s166] sm:$0xf]
      %v176 = vld [vmem:[%s166 + $0x4] sm:$0xf]
      %v177 = vld [vmem:[%s166 + $0x8] sm:$0xf]
      %v178 = vld [vmem:[%s166 + $0xc] sm:$0xf]
      %v179 = vld [vmem:[%s166 + $0x10] sm:$0xf]
      %v180 = vld [vmem:[%s166 + $0x14] sm:$0xf]
      %v181 = vld [vmem:[%s1] sm:$0xf]
      %v182 = vld [vmem:[%s1 + $0x4] sm:$0xf]
      %v183 = vld [vmem:[%s1 + $0x8] sm:$0xf]
      %v184 = vld [vmem:[%s1 + $0xc] sm:$0xf]
      %v185 = vld [vmem:[%s1 + $0x10] sm:$0xf]
      %v186 = vld [vmem:[%s1 + $0x14] sm:$0xf]
      %v187 = vld [vmem:[%s1 + $0x18] sm:$0xf]
      %v188 = vld [vmem:[%s1 + $0x1c] sm:$0xf]
      %v189 = vld [vmem:[%s2] sm:$0x1]
      %v191 = vlaneseq
      %v192 = vshrl.u32 %v191, 7
      %v193 = vsub.s32 0, %v192
      %v194 = vrot.slane %v189, %v193
      %v202 = vunpack.c.l.b16 %v175
      %v203 = vunpack.c.l.b16 %v176
      %v204 = vunpack.c.l.b16 %v177
      %v205 = vunpack.c.l.b16 %v178
      %v206 = vunpack.c.l.b16 %v179
      %v207 = vunpack.c.l.b16 %v180
      %v208 = vpack.c.b16 %v203, %v202
      %v209 = vpack.c.b16 %v205, %v204
      %v210 = vpack.c.b16 %v207, %v206
      %v219 = vunpack.c.l.b16 %v181
      %v220 = vunpack.c.l.b16 %v182
      %v221 = vunpack.c.l.b16 %v183
      %v222 = vunpack.c.l.b16 %v184
      %v223 = vunpack.c.l.b16 %v185
      %v224 = vunpack.c.l.b16 %v186
      %v225 = vunpack.c.l.b16 %v187
      %v226 = vunpack.c.l.b16 %v188
      %v227 = vpack.c.b16 %v220, %v219
      %v228 = vpack.c.b16 %v222, %v221
      %v229 = vpack.c.b16 %v224, %v223
      %v230 = vpack.c.b16 %v226, %v225
      %vm235 = vcmask 523264
      %v237 = vsel %vm235, %v208, 0
      %v240 = vsel %vm235, %v209, 0
      %v243 = vsel %vm235, %v210, 0
      %245 = vmatprep.subr.bf16.mxu0 0
      %246 = vmatpush1.bf16.msra.mxu0 0
      %247 = vmatprep.subr.bf16.mxu0 0
      %248 = vmatpush1.bf16.msra.mxu0 0
      %249 = vmatprep.subr.bf16.mxu0 0
      %250 = vmatpush1.bf16.msra.mxu0 0
      %251 = vmatprep.subr.bf16.mxu0 0
      %252 = vmatpush1.bf16.msra.mxu0 0
      %253 = vmatprep.subr.bf16.mxu0 0
      %254 = vmatpush1.bf16.msra.mxu0 %v230
      %255 = vmatprep.subr.bf16.mxu0 0
      %256 = vmatpush1.bf16.msra.mxu0 %v229
      %257 = vmatprep.subr.bf16.mxu0 0
      %258 = vmatpush1.bf16.msra.mxu0 %v228
      %259 = vmatprep.subr.bf16.mxu0 0
      %260 = vmatpush1.bf16.msra.mxu0 %v227
      %261 = vmatprep.subr.bf16.mxu0 0
      %262 = vmatpush2.bf16.msra.mxu0 0
      %263 = vmatprep.subr.bf16.mxu0 0
      %264 = vmatpush2.bf16.msra.mxu0 0
      %265 = vmatprep.subr.bf16.mxu0 0
      %266 = vmatpush2.bf16.msra.mxu0 0
      %267 = vmatprep.subr.bf16.mxu0 0
      %268 = vmatpush2.bf16.msra.mxu0 0
      %269 = vmatprep.subr.bf16.mxu0 0
      %270 = vmatpush2.bf16.msra.mxu0 0
      %271 = vmatprep.subr.bf16.mxu0 0
      %272 = vmatpush2.bf16.msra.mxu0 0
      %273 = vmatprep.subr.bf16.mxu0 0
      %274 = vmatpush2.bf16.msra.mxu0 0
      %275 = vmatprep.subr.bf16.mxu0 0
      %276 = vmatpush2.bf16.msra.mxu0 0
      %277 = vmatprep.mubr.bf16.mxu0 0
      %278 = vmatmul.mubr.bf16.gmra.mxu0 %v237
      %v279 = vpop.f32.mrf.mxu0
      %v280 = vadd.f32 %v194, %v279
      %v281 = vpop.f32.mrf.mxu0
      %v282 = vpop.f32.mrf.mxu0
      %v283 = vadd.f32 %v194, %v282
      %v284 = vpop.f32.mrf.mxu0
      %285 = vmatprep.mubr.bf16.mxu0 0
      %286 = vmatmul.mubr.bf16.gmra.mxu0 %v240
      %v287 = vpop.f32.mrf.mxu0
      %v288 = vadd.f32 %v194, %v287
      %v289 = vpop.f32.mrf.mxu0
      %v290 = vpop.f32.mrf.mxu0
      %v291 = vadd.f32 %v194, %v290
      %v292 = vpop.f32.mrf.mxu0
      %293 = vmatprep.mubr.bf16.mxu0 0
      %294 = vmatmul.mubr.bf16.gmra.mxu0 %v243
      %v295 = vpop.f32.mrf.mxu0
      %v296 = vadd.f32 %v194, %v295
      %v297 = vpop.f32.mrf.mxu0
      %v298 = vpop.f32.mrf.mxu0
      %v299 = vadd.f32 %v194, %v298
      %v300 = vpop.f32.mrf.mxu0
      %301 = vdwg.mxu0
      %v302 = vmax.f32 %v280, 0.0
      %v303 = vmax.f32 %v283, 0.0
      %v304 = vmax.f32 %v288, 0.0
      %v305 = vmax.f32 %v291, 0.0
      %v306 = vmax.f32 %v296, 0.0
      %v307 = vmax.f32 %v299, 0.0
      %v308 = vpack.c.bf16 %v303, %v302
      %v309 = vpack.c.bf16 %v305, %v304
      %v310 = vpack.c.bf16 %v307, %v306
      %v314 = vunpack.c.l.b16 %v308
      %v315 = vunpack.c.h.b16 %v308
      %v316 = vunpack.c.l.b16 %v309
      %v317 = vunpack.c.h.b16 %v309
      %v318 = vunpack.c.l.b16 %v310
      %v319 = vunpack.c.h.b16 %v310
      %v320 = vpack.c.b16 %v314, %v314
      %v321 = vpack.c.b16 %v315, %v315
      %v322 = vpack.c.b16 %v316, %v316
      %v323 = vpack.c.b16 %v317, %v317
      %v324 = vpack.c.b16 %v318, %v318
      %v325 = vpack.c.b16 %v319, %v319
      %332 = vst [vmem:[%s172] sm:$0xf] %v320
      %333 = vst [vmem:[%s172 + $0x4] sm:$0xf] %v321
      %334 = vst [vmem:[%s172 + $0x8] sm:$0xf] %v322
      %335 = vst [vmem:[%s172 + $0xc] sm:$0xf] %v323
      %336 = vst [vmem:[%s172 + $0x10] sm:$0xf] %v324
      %337 = vst [vmem:[%s172 + $0x14] sm:$0xf] %v325
      %s338 = smul.u32 6, %s14
      %p339 = scmp.lt.s32.totalorder %s338, 23
      %s340 = scalar_select %p339, %s338, 23
      %s341 = smul.addr %s340, 4
      %s342 = scalar_lea.vmem %s3, %s341
      // Predicated region
      $region33: #{basic_block_transposed.1} parent=31 // pred_check
        %p343 = pneg %p100
      $region34: #{basic_block_transposed.1} parent=31 // pred_check_branch
        %345 = sbr.rel (%p343) target = $region36
      $region35: #{basic_block_transposed.1} parent=31 // pred_region
        %s346 = smul.u32 6, %s14
      $region36: #{basic_block_transposed.1} parent=31 // pred_fallthru
        _
    $region32: #{basic_block_transposed.1} parent=5 // pred_fallthru
      _
    %p347 = scmp.le.s32.totalorder 2, %s9
    // Predicated region
    $region37: #{basic_block_transposed.1} parent=5 // pred_check
      %p348 = pneg %p347
    $region38: #{basic_block_transposed.1} parent=5 // pred_check_branch
      %350 = sbr.rel (%p348) target = $region40
    $region39: #{basic_block_transposed.1} parent=5 // pred_region
      %s351 = ssub.s32 %s9, 2
      // Predicated region
      $region41: #{basic_block_transposed.1} parent=39 // pred_check
        %p352 = pneg %p106
      $region42: #{basic_block_transposed.1} parent=39 // pred_check_branch
        %354 = sbr.rel (%p352) target = $region44
      $region43: #{basic_block_transposed.1} parent=39 // pred_region
        %s355 = smul.u32 6, %s15
        %p356 = scmp.lt.s32.totalorder %s355, 23
        %s357 = scalar_select %p356, %s355, 23
        %s358 = smul.addr %s357, 4
        %s359 = scalar_lea.vmem %s3, %s358
      $region44: #{basic_block_transposed.1} parent=39 // pred_fallthru
        _
    $region40: #{basic_block_transposed.1} parent=5 // pred_fallthru
      _
  $region6: #{basic_block_transposed.1} parent=0 // loop_footer
    %s13 = sadd.s32 1, %s9
  $region7: #{basic_block_transposed.1} parent=0 // loop_footer_branch
    %8 = sbr.rel target = $region3
  $region8: #{basic_block_transposed.1} parent=0 // loop_exit
    _

</llo_original>
